<compile_context>
chip_gen: v6e
topology: v6e:2x2x1
jax: 0.10.0
libtpu: 0.0.40
codegen_flags: <defaults>
</compile_context>

<pallas_src>
import functools

import jax
import jax.numpy as jnp
from jax.experimental import pallas as pl
from jax.experimental.pallas import tpu as pltpu


def _round_up(x, m):
    return ((x + m - 1) // m) * m


# -----------------------------------------------------------------------------
# Kernel 1: one GCN smoothing hop fused with the running layer-sum
#     x_new   = adj @ x
#     acc_new = (acc_in + x_new) * acc_scale      (acc_scale = mean factor on last hop)
# -----------------------------------------------------------------------------
def _gcn_hop_kernel(adj_ref, x_ref, acc_in_ref, x_out_ref, acc_out_ref, acc_scr,
                    *, acc_scale):
    k = pl.program_id(1)

    @pl.when(k == 0)
    def _():
        acc_scr[...] = jnp.zeros_like(acc_scr)

    acc_scr[...] += jnp.dot(adj_ref[...], x_ref[...],
                            preferred_element_type=jnp.float32)

    @pl.when(k == pl.num_programs(1) - 1)
    def _():
        x_new = acc_scr[...]
        x_out_ref[...] = x_new.astype(x_out_ref.dtype)
        acc_out_ref[...] = (
            (acc_in_ref[...].astype(jnp.float32) + x_new) * acc_scale
        ).astype(acc_out_ref.dtype)


def gcn_hop(adj, x, acc, *, acc_scale, tile_m=256, tile_k=256):
    np_, dp = x.shape
    assert adj.shape == (np_, np_)
    assert np_ % tile_m == 0 and np_ % tile_k == 0 and dp % 128 == 0
    kern = functools.partial(_gcn_hop_kernel, acc_scale=acc_scale)
    return pl.pallas_call(
        kern,
        out_shape=(jax.ShapeDtypeStruct((np_, dp), x.dtype),
                   jax.ShapeDtypeStruct((np_, dp), x.dtype)),
        grid_spec=pltpu.PrefetchScalarGridSpec(
            num_scalar_prefetch=0,
            grid=(np_ // tile_m, np_ // tile_k),
            in_specs=[
                pl.BlockSpec((tile_m, tile_k), lambda i, k: (i, k)),
                pl.BlockSpec((tile_k, dp), lambda i, k: (k, 0)),
                pl.BlockSpec((tile_m, dp), lambda i, k: (i, 0)),
            ],
            out_specs=[
                pl.BlockSpec((tile_m, dp), lambda i, k: (i, 0)),
                pl.BlockSpec((tile_m, dp), lambda i, k: (i, 0)),
            ],
            scratch_shapes=[pltpu.VMEM((tile_m, dp), jnp.float32)],
        ),
        compiler_params=pltpu.CompilerParams(
            dimension_semantics=("parallel", "arbitrary")),
    )(adj, x, acc)


# -----------------------------------------------------------------------------
# Kernel 2: a full GRU layer over a (L, B, D) sequence with h0 = 0.
# Grid walks time sequentially; hidden state lives in VMEM scratch; the final
# hidden state is written once at t == L - 1.  Gate order r, z, n (torch.nn.GRU);
# weights stored pre-transposed as (3, D, D) so the kernel computes x @ W.
# -----------------------------------------------------------------------------
def _gru_seq_kernel(x_ref, wi_ref, wh_ref, bi_ref, bh_ref, h_out_ref, h_scr):
    t = pl.program_id(0)

    @pl.when(t == 0)
    def _():
        h_scr[...] = jnp.zeros_like(h_scr)

    x = x_ref[0].astype(jnp.float32)      # (B, D)
    h = h_scr[...]                        # (B, D) f32

    gi_r = jnp.dot(x, wi_ref[0], preferred_element_type=jnp.float32) + bi_ref[0]
    gi_z = jnp.dot(x, wi_ref[1], preferred_element_type=jnp.float32) + bi_ref[1]
    gi_n = jnp.dot(x, wi_ref[2], preferred_element_type=jnp.float32) + bi_ref[2]
    gh_r = jnp.dot(h, wh_ref[0], preferred_element_type=jnp.float32) + bh_ref[0]
    gh_z = jnp.dot(h, wh_ref[1], preferred_element_type=jnp.float32) + bh_ref[1]
    gh_n = jnp.dot(h, wh_ref[2], preferred_element_type=jnp.float32) + bh_ref[2]

    r = jax.nn.sigmoid(gi_r + gh_r)
    z = jax.nn.sigmoid(gi_z + gh_z)
    n = jnp.tanh(gi_n + r * gh_n)
    h_new = (1.0 - z) * n + z * h
    h_scr[...] = h_new

    @pl.when(t == pl.num_programs(0) - 1)
    def _():
        h_out_ref[...] = h_new.astype(h_out_ref.dtype)


def gru_layer(seq, wi, wh, bi, bh):
    L, B, Dp = seq.shape
    return pl.pallas_call(
        _gru_seq_kernel,
        out_shape=jax.ShapeDtypeStruct((B, Dp), seq.dtype),
        grid_spec=pltpu.PrefetchScalarGridSpec(
            num_scalar_prefetch=0,
            grid=(L,),
            in_specs=[
                pl.BlockSpec((1, B, Dp), lambda t: (t, 0, 0)),
                pl.BlockSpec((3, Dp, Dp), lambda t: (0, 0, 0)),
                pl.BlockSpec((3, Dp, Dp), lambda t: (0, 0, 0)),
                pl.BlockSpec((3, 1, Dp), lambda t: (0, 0, 0)),
                pl.BlockSpec((3, 1, Dp), lambda t: (0, 0, 0)),
            ],
            out_specs=pl.BlockSpec((B, Dp), lambda t: (0, 0)),
            scratch_shapes=[pltpu.VMEM((B, Dp), jnp.float32)],
        ),
        compiler_params=pltpu.CompilerParams(
            dimension_semantics=("arbitrary",)),
    )(seq, wi, wh, bi, bh)


# -----------------------------------------------------------------------------
# Wrapper: pad to lane-dense / tile-aligned shapes, run encoder hops + GRU stack.
# -----------------------------------------------------------------------------
def lg2seq_signal(u_embs, i_embs, adj, user_seq,
                  gru_wi, gru_wh, gru_bi, gru_bh,
                  num_layers, *, row_tile=256):
    assert num_layers >= 1
    n_users, D = u_embs.shape
    n_items = i_embs.shape[0]
    N = n_users + n_items
    Dp = _round_up(D, 128)
    Np = _round_up(N, row_tile)

    x0 = jnp.concatenate([u_embs, i_embs], axis=0)
    x0p = jnp.pad(x0, ((0, Np - N), (0, Dp - D)))
    adjp = jnp.pad(adj, ((0, Np - N), (0, Np - N)))

    # encoder: num_layers fused (matmul + layer-sum) hops; mean folded into the last hop.
    x, acc = x0p, x0p
    inv = 1.0 / float(num_layers + 1)
    for l in range(num_layers):
        scale = inv if l == num_layers - 1 else 1.0
        x, acc = gcn_hop(adjp, x, acc, acc_scale=scale,
                         tile_m=row_tile, tile_k=row_tile)
    emb_p = acc                       # (Np, Dp) layer-averaged, zero-padded
    emb = emb_p[:N, :D]

    # decoder: gather user sequences (plain JAX) and run stacked GRUs on padded D.
    wi_p = jnp.pad(gru_wi, ((0, 0), (0, 0), (0, Dp - D), (0, Dp - D)))
    wh_p = jnp.pad(gru_wh, ((0, 0), (0, 0), (0, Dp - D), (0, Dp - D)))
    bi_p = jnp.pad(gru_bi, ((0, 0), (0, 0), (0, 0), (0, Dp - D)))
    bh_p = jnp.pad(gru_bh, ((0, 0), (0, 0), (0, 0), (0, Dp - D)))

    de = jnp.transpose(emb_p[user_seq], (1, 0, 2))    # (seq_len, batch, Dp)
    h = None
    for l in range(num_layers):
        h = gru_layer(de, wi_p[l], wh_p[l], bi_p[l], bh_p[l])   # (batch, Dp)
        de = h[None, :, :]
    return h[:, :D], emb


# -----------------------------------------------------------------------------
# Pure-JAX reference mirroring the PyTorch forward literally.
# -----------------------------------------------------------------------------
def lg2seq_signal_ref(u_embs, i_embs, adj, user_seq,
                      gru_wi, gru_wh, gru_bi, gru_bh, num_layers):
    hp = jax.lax.Precision.HIGHEST
    mm = lambda a, b: jnp.dot(a, b, precision=hp)

    all_embs = jnp.concatenate([u_embs, i_embs], axis=0)
    embs_list = [all_embs]
    x = all_embs
    for _ in range(num_layers):
        x = mm(adj, x)
        embs_list.append(x)
    emb = jnp.mean(jnp.stack(embs_list, axis=1), axis=1)

    de = jnp.transpose(emb[user_seq], (1, 0, 2))     # (L, B, D)
    D = emb.shape[1]
    h = None
    for l in range(num_layers):
        hh = jnp.zeros((de.shape[1], D), jnp.float32)
        for t in range(de.shape[0]):
            xt = de[t]
            gi_r = mm(xt, gru_wi[l, 0]) + gru_bi[l, 0]
            gi_z = mm(xt, gru_wi[l, 1]) + gru_bi[l, 1]
            gi_n = mm(xt, gru_wi[l, 2]) + gru_bi[l, 2]
            gh_r = mm(hh, gru_wh[l, 0]) + gru_bh[l, 0]
            gh_z = mm(hh, gru_wh[l, 1]) + gru_bh[l, 1]
            gh_n = mm(hh, gru_wh[l, 2]) + gru_bh[l, 2]
            r = jax.nn.sigmoid(gi_r + gh_r)
            z = jax.nn.sigmoid(gi_z + gh_z)
            n = jnp.tanh(gi_n + r * gh_n)
            hh = (1.0 - z) * n + z * hh
        h = hh
        de = h[None, :, :]
    return h, emb


if __name__ == "__main__":
    emb_dim = 64
    num_layers = 2
    n_users, n_items = 8, 16
    batch, seq_len = 4, 6
    N = n_users + n_items

    key = jax.random.PRNGKey(0)
    ku, ki, kr, ks, kwi, kwh, kbi, kbh = jax.random.split(key, 8)

    u_embs = jax.random.normal(ku, (n_users, emb_dim), jnp.float32)
    i_embs = jax.random.normal(ki, (n_items, emb_dim), jnp.float32)

    # Dense symmetric-normalized bipartite adjacency standing in for ui_bigraph.
    inter = (jax.random.uniform(kr, (n_users, n_items)) < 0.35).astype(jnp.float32)
    adj = jnp.zeros((N, N), jnp.float32)
    adj = adj.at[:n_users, n_users:].set(inter)
    adj = adj.at[n_users:, :n_users].set(inter.T)
    deg = jnp.maximum(jnp.sum(adj, axis=1), 1.0)
    d_inv_sqrt = 1.0 / jnp.sqrt(deg)
    adj = adj * d_inv_sqrt[:, None] * d_inv_sqrt[None, :]

    user_seq = jax.random.randint(ks, (batch, seq_len), 0, N, dtype=jnp.int32)

    # GRU parameters, stored pre-transposed so x @ W gives the gate pre-activation.
    scale = 1.0 / jnp.sqrt(jnp.float32(emb_dim))
    gru_wi = jax.random.uniform(kwi, (num_layers, 3, emb_dim, emb_dim), jnp.float32, -scale, scale)
    gru_wh = jax.random.uniform(kwh, (num_layers, 3, emb_dim, emb_dim), jnp.float32, -scale, scale)
    gru_bi = jax.random.uniform(kbi, (num_layers, 3, 1, emb_dim), jnp.float32, -scale, scale)
    gru_bh = jax.random.uniform(kbh, (num_layers, 3, 1, emb_dim), jnp.float32, -scale, scale)

    h_out, emb_out = lg2seq_signal(u_embs, i_embs, adj, user_seq,
                                   gru_wi, gru_wh, gru_bi, gru_bh, num_layers)
    h_out = jax.block_until_ready(h_out)
    emb_out = jax.block_until_ready(emb_out)

    h_ref, emb_ref = lg2seq_signal_ref(u_embs, i_embs, adj, user_seq,
                                       gru_wi, gru_wh, gru_bi, gru_bh, num_layers)

    assert h_out.shape == (batch, emb_dim)
    assert emb_out.shape == (N, emb_dim)
    assert jnp.allclose(emb_out, emb_ref, atol=1e-4, rtol=1e-4)
    assert jnp.allclose(h_out, h_ref, atol=1e-4, rtol=1e-4)

    print("KERNEL_OK")
</pallas_src>

<mosaic_0001>
module attributes {stable_mosaic.version = 11 : i64} {
  func.func @_gcn_hop_kernel(%arg0: i32, %arg1: i32, %arg2: memref<256x256xf32, #tpu.memory_space<vmem>>, %arg3: memref<256x128xf32, #tpu.memory_space<vmem>>, %arg4: memref<256x128xf32, #tpu.memory_space<vmem>>, %arg5: memref<256x128xf32, #tpu.memory_space<vmem>>, %arg6: memref<256x128xf32, #tpu.memory_space<vmem>>, %arg7: memref<256x128xf32, #tpu.memory_space<vmem>>) attributes {dimension_semantics = [#tpu.dimension_semantics<parallel>, #tpu.dimension_semantics<arbitrary>], iteration_bounds = array<i64: 1, 1>, scalar_prefetch = 0 : i64, scratch_operands = 1 : i64, tpu.core_type = #tpu.core_type<tc>, window_params = [{transform_indices = @transform_0, window_bounds = array<i64: 256, 256>}, {transform_indices = @transform_1, window_bounds = array<i64: 256, 128>}, {transform_indices = @transform_2, window_bounds = array<i64: 256, 128>}, {transform_indices = @transform_3, window_bounds = array<i64: 256, 128>}, {transform_indices = @transform_4, window_bounds = array<i64: 256, 128>}]} {
    %c0_i32 = arith.constant 0 : i32
    %0 = arith.cmpi eq, %arg1, %c0_i32 : i32
    %1 = arith.extui %0 : i1 to i32
    %c0_i32_0 = arith.constant 0 : i32
    %2 = arith.cmpi ne, %1, %c0_i32_0 : i32
    scf.if %2 {
      %cst_10 = arith.constant 0.000000e+00 : f32
      %12 = vector.broadcast %cst_10 : f32 to vector<256x128xf32>
      %c0_11 = arith.constant 0 : index
      %c0_12 = arith.constant 0 : index
      %13 = vector.load %arg7[%c0_11, %c0_12] : memref<256x128xf32, #tpu.memory_space<vmem>>, vector<256x128xf32>
      tpu.vector_store %arg7[%c0_11, %c0_12], %12 {strides = array<i32>} : memref<256x128xf32, #tpu.memory_space<vmem>>, vector<256x128xf32>,
    } else {
    }
    %c0 = arith.constant 0 : index
    %c0_1 = arith.constant 0 : index
    %3 = vector.load %arg7[%c0, %c0_1] : memref<256x128xf32, #tpu.memory_space<vmem>>, vector<256x128xf32>
    %c0_2 = arith.constant 0 : index
    %c0_3 = arith.constant 0 : index
    %4 = vector.load %arg2[%c0_2, %c0_3] : memref<256x256xf32, #tpu.memory_space<vmem>>, vector<256x256xf32>
    %c0_4 = arith.constant 0 : index
    %c0_5 = arith.constant 0 : index
    %5 = vector.load %arg3[%c0_4, %c0_5] : memref<256x128xf32, #tpu.memory_space<vmem>>, vector<256x128xf32>
    %cst = arith.constant dense<0.000000e+00> : vector<256x128xf32>
    %6 = tpu.matmul %4, %5, %cst {dimension_numbers = #tpu.dot_dimension_numbers<[1], [0], [0], [1], [0, 0, 1, 1], [], []>} : vector<256x256xf32>, vector<256x128xf32>, vector<256x128xf32> -> vector<256x128xf32>
    %7 = arith.addf %3, %6 : vector<256x128xf32>
    %c0_6 = arith.constant 0 : index
    %c0_7 = arith.constant 0 : index
    %8 = vector.load %arg7[%c0_6, %c0_7] : memref<256x128xf32, #tpu.memory_space<vmem>>, vector<256x128xf32>
    tpu.vector_store %arg7[%c0_6, %c0_7], %7 {strides = array<i32>} : memref<256x128xf32, #tpu.memory_space<vmem>>, vector<256x128xf32>,
    %c0_i32_8 = arith.constant 0 : i32
    %9 = arith.cmpi eq, %arg1, %c0_i32_8 : i32
    %10 = arith.extui %9 : i1 to i32
    %c0_i32_9 = arith.constant 0 : i32
    %11 = arith.cmpi ne, %10, %c0_i32_9 : i32
    scf.if %11 {
      %c0_10 = arith.constant 0 : index
      %c0_11 = arith.constant 0 : index
      %12 = vector.load %arg7[%c0_10, %c0_11] : memref<256x128xf32, #tpu.memory_space<vmem>>, vector<256x128xf32>
      %c0_12 = arith.constant 0 : index
      %c0_13 = arith.constant 0 : index
      %13 = vector.load %arg5[%c0_12, %c0_13] : memref<256x128xf32, #tpu.memory_space<vmem>>, vector<256x128xf32>
      tpu.vector_store %arg5[%c0_12, %c0_13], %12 {strides = array<i32>} : memref<256x128xf32, #tpu.memory_space<vmem>>, vector<256x128xf32>,
      %c0_14 = arith.constant 0 : index
      %c0_15 = arith.constant 0 : index
      %14 = vector.load %arg4[%c0_14, %c0_15] : memref<256x128xf32, #tpu.memory_space<vmem>>, vector<256x128xf32>
      %15 = arith.addf %14, %12 : vector<256x128xf32>
      %cst_16 = arith.constant 1.000000e+00 : f32
      %16 = vector.broadcast %cst_16 : f32 to vector<256x128xf32>
      %17 = arith.mulf %15, %16 : vector<256x128xf32>
      %c0_17 = arith.constant 0 : index
      %c0_18 = arith.constant 0 : index
      %18 = vector.load %arg6[%c0_17, %c0_18] : memref<256x128xf32, #tpu.memory_space<vmem>>, vector<256x128xf32>
      tpu.vector_store %arg6[%c0_17, %c0_18], %17 {strides = array<i32>} : memref<256x128xf32, #tpu.memory_space<vmem>>, vector<256x128xf32>,
    } else {
    }
    return
  }
  func.func @transform_0(%arg0: i32, %arg1: i32) -> (i32, i32) {
    %c0_i32 = arith.constant 0 : i32
    return %arg0, %arg1 : i32, i32
  }
  func.func @transform_1(%arg0: i32, %arg1: i32) -> (i32, i32) {
    %c0_i32 = arith.constant 0 : i32
    %c0_i32_0 = arith.constant 0 : i32
    return %arg1, %c0_i32 : i32, i32
  }
  func.func @transform_2(%arg0: i32, %arg1: i32) -> (i32, i32) {
    %c0_i32 = arith.constant 0 : i32
    %c0_i32_0 = arith.constant 0 : i32
    return %arg0, %c0_i32 : i32, i32
  }
  func.func @transform_3(%arg0: i32, %arg1: i32) -> (i32, i32) {
    %c0_i32 = arith.constant 0 : i32
    %c0_i32_0 = arith.constant 0 : i32
    return %arg0, %c0_i32 : i32, i32
  }
  func.func @transform_4(%arg0: i32, %arg1: i32) -> (i32, i32) {
    %c0_i32 = arith.constant 0 : i32
    %c0_i32_0 = arith.constant 0 : i32
    return %arg0, %c0_i32 : i32, i32
  }
}

</mosaic_0001>

<llo_original>
// kernel: tpu_custom_call.1
$region0: #{tpu_custom_call.1}
  #allocation0 [shape = 'u32[]', space=smem, size = 0x4, offset = 0x4, fixed_abs, tag = 'smem constant byte address 0x4 - core index']
  #allocation1 [shape = 'u32[144,128]{1,0:T(1,128)}', space=vmem, size = 0x12000, scoped, tag = 'internal scratch']
  #allocation2 [shape = 'f32[256,128]{1,0:T(8,128)}', space=vmem, size = 0x20000, scoped, tag = 'scratch operand']
  %s0 = inlined_call_operand.hbm [shape: f32[256,256], index: 0, kind: input, shape index: {}]
  %s1 = inlined_call_operand.hbm [shape: f32[256,128], index: 1, kind: input, shape index: {}]
  %s2 = inlined_call_operand.hbm [shape: f32[256,128], index: 2, kind: input, shape index: {}]
  %s3 = inlined_call_operand.hbm [shape: f32[256,128], index: 3, kind: output, shape index: {0}]
  %s4 = inlined_call_operand.hbm [shape: f32[256,128], index: 4, kind: output, shape index: {1}]
  %5 = xla_tuple %s3, %s4
  %s6 = sld [smem:[#allocation0]]
  $region50: #{tpu_custom_call.1} parent=0
    _
  %s8 = ssub.s32 1, %s6
  %s9 = scalar_select 0, %s8, %s6
  $region1: #{tpu_custom_call.1} parent=0
    #allocation3 [shape = 'u8[262144]{0}', space=vmem, size = 0x40000, scoped, tag = 'input window, operand 0, single buffered']
    #allocation4 [shape = 's32[1]{0}', space=sflag, size = 0x4, scoped, tag = 'scoped memory for tpu_custom_call.1']
    #allocation5 [shape = 's32[1]{0}', space=sflag, size = 0x4, scoped, tag = 'scoped memory for tpu_custom_call.1']
    #allocation6 [shape = 'u8[131072]{0}', space=vmem, size = 0x20000, scoped, tag = 'input window, operand 1, single buffered']
    #allocation7 [shape = 's32[1]{0}', space=sflag, size = 0x4, scoped, tag = 'scoped memory for tpu_custom_call.1']
    #allocation8 [shape = 'u8[131072]{0}', space=vmem, size = 0x20000, scoped, tag = 'input window, operand 2, single buffered']
    #allocation9 [shape = 'u8[131072]{0}', space=vmem, size = 0x20000, scoped, tag = 'output window, operand 0, single buffered']
    #allocation10 [shape = 'u8[131072]{0}', space=vmem, size = 0x20000, scoped, tag = 'output window, operand 1, single buffered']
    #allocation11 [shape = 's32[1]{0}', space=sflag, size = 0x4, scoped, tag = 'scoped memory for tpu_custom_call.1']
    %10 = vsyncpa [#allocation4], 0
    %11 = vsyncpa [#allocation7], 0
    %12 = vsyncpa [#allocation5], 0
    %13 = vsyncpa [#allocation11], 0
    // Predicated region
    $region2: #{tpu_custom_call.1} parent=1 // pred_check
      _
    $region3: #{tpu_custom_call.1} parent=1 // pred_check_branch
      %15 = sbr.rel (0) target = $region5
    $region4: #{tpu_custom_call.1} parent=1 // pred_region
      %s17 = ssub.s32 8192, 8192
      %18 = vsyncadd [#allocation4], %s17
      %s19 = sshll.u32 [#allocation3], 4
      %s20 = int_to_ptr.vmem [resolvable:$true] %s19
      %25 = dma.hbm_to_vmem [thread:$0]  %s0, 8192, %s20, [#allocation4], 256, 256, 16
    $region5: #{tpu_custom_call.1} parent=1 // pred_fallthru
      _
    // Predicated region
    $region6: #{tpu_custom_call.1} parent=1 // pred_check
      _
    $region7: #{tpu_custom_call.1} parent=1 // pred_check_branch
      %27 = sbr.rel (0) target = $region9
    $region8: #{tpu_custom_call.1} parent=1 // pred_region
      %s29 = ssub.s32 4096, 4096
      %30 = vsyncadd [#allocation7], %s29
      %s31 = sshll.u32 [#allocation6], 4
      %s32 = int_to_ptr.vmem [resolvable:$true] %s31
      %37 = dma.hbm_to_vmem [thread:$0]  %s1, 4096, %s32, [#allocation7], 128, 128, 8
    $region9: #{tpu_custom_call.1} parent=1 // pred_fallthru
      _
    // Predicated region
    $region10: #{tpu_custom_call.1} parent=1 // pred_check
      _
    $region11: #{tpu_custom_call.1} parent=1 // pred_check_branch
      %39 = sbr.rel (0) target = $region13
    $region12: #{tpu_custom_call.1} parent=1 // pred_region
      %s41 = ssub.s32 4096, 4096
      %42 = vsyncadd [#allocation7], %s41
      %s43 = sshll.u32 [#allocation8], 4
      %s44 = int_to_ptr.vmem [resolvable:$true] %s43
      %49 = dma.hbm_to_vmem [thread:$0]  %s2, 4096, %s44, [#allocation7], 128, 128, 8
    $region13: #{tpu_custom_call.1} parent=1 // pred_fallthru
      _
    // Predicated region
    $region14: #{tpu_custom_call.1} parent=1 // pred_check
      _
    $region15: #{tpu_custom_call.1} parent=1 // pred_check_branch
      %51 = sbr.rel (0) target = $region17
    $region16: #{tpu_custom_call.1} parent=1 // pred_region
      %52 = dma.done [#allocation4], 8192
    $region17: #{tpu_custom_call.1} parent=1 // pred_fallthru
      _
    // Predicated region
    $region18: #{tpu_custom_call.1} parent=1 // pred_check
      _
    $region19: #{tpu_custom_call.1} parent=1 // pred_check_branch
      %54 = sbr.rel (0) target = $region21
    $region20: #{tpu_custom_call.1} parent=1 // pred_region
      %55 = dma.done [#allocation7], 4096
    $region21: #{tpu_custom_call.1} parent=1 // pred_fallthru
      _
    // Predicated region
    $region22: #{tpu_custom_call.1} parent=1 // pred_check
      _
    $region23: #{tpu_custom_call.1} parent=1 // pred_check_branch
      %57 = sbr.rel (0) target = $region25
    $region24: #{tpu_custom_call.1} parent=1 // pred_region
      %58 = dma.done [#allocation7], 4096
    $region25: #{tpu_custom_call.1} parent=1 // pred_fallthru
      _
    %p59 = scmp.eq.s32.totalorder 0, 0
    // Predicated region
    $region26: #{tpu_custom_call.1} parent=1 // pred_check
      %p60 = pneg %p59
    $region27: #{tpu_custom_call.1} parent=1 // pred_check_branch
      %62 = sbr.rel (%p60) target = $region29
    $region28: #{tpu_custom_call.1} parent=1 // pred_region
      %63 = vst [vmem:[#allocation2] sm:$0xff] 0.0
      %64 = vst [vmem:[#allocation2 + $0x8] sm:$0xff] 0.0
      %65 = vst [vmem:[#allocation2 + $0x10] sm:$0xff] 0.0
      %66 = vst [vmem:[#allocation2 + $0x18] sm:$0xff] 0.0
      %67 = vst [vmem:[#allocation2 + $0x20] sm:$0xff] 0.0
      %68 = vst [vmem:[#allocation2 + $0x28] sm:$0xff] 0.0
      %69 = vst [vmem:[#allocation2 + $0x30] sm:$0xff] 0.0
      %70 = vst [vmem:[#allocation2 + $0x38] sm:$0xff] 0.0
      %71 = vst [vmem:[#allocation2 + $0x40] sm:$0xff] 0.0
      %72 = vst [vmem:[#allocation2 + $0x48] sm:$0xff] 0.0
      %73 = vst [vmem:[#allocation2 + $0x50] sm:$0xff] 0.0
      %74 = vst [vmem:[#allocation2 + $0x58] sm:$0xff] 0.0
      %75 = vst [vmem:[#allocation2 + $0x60] sm:$0xff] 0.0
      %76 = vst [vmem:[#allocation2 + $0x68] sm:$0xff] 0.0
      %77 = vst [vmem:[#allocation2 + $0x70] sm:$0xff] 0.0
      %78 = vst [vmem:[#allocation2 + $0x78] sm:$0xff] 0.0
      %79 = vst [vmem:[#allocation2 + $0x80] sm:$0xff] 0.0
      %80 = vst [vmem:[#allocation2 + $0x88] sm:$0xff] 0.0
      %81 = vst [vmem:[#allocation2 + $0x90] sm:$0xff] 0.0
      %82 = vst [vmem:[#allocation2 + $0x98] sm:$0xff] 0.0
      %83 = vst [vmem:[#allocation2 + $0xa0] sm:$0xff] 0.0
      %84 = vst [vmem:[#allocation2 + $0xa8] sm:$0xff] 0.0
      %85 = vst [vmem:[#allocation2 + $0xb0] sm:$0xff] 0.0
      %86 = vst [vmem:[#allocation2 + $0xb8] sm:$0xff] 0.0
      %87 = vst [vmem:[#allocation2 + $0xc0] sm:$0xff] 0.0
      %88 = vst [vmem:[#allocation2 + $0xc8] sm:$0xff] 0.0
      %89 = vst [vmem:[#allocation2 + $0xd0] sm:$0xff] 0.0
      %90 = vst [vmem:[#allocation2 + $0xd8] sm:$0xff] 0.0
      %91 = vst [vmem:[#allocation2 + $0xe0] sm:$0xff] 0.0
      %92 = vst [vmem:[#allocation2 + $0xe8] sm:$0xff] 0.0
      %93 = vst [vmem:[#allocation2 + $0xf0] sm:$0xff] 0.0
      %94 = vst [vmem:[#allocation2 + $0xf8] sm:$0xff] 0.0
    $region29: #{tpu_custom_call.1} parent=1 // pred_fallthru
      _
    %v95 = vld [vmem:[#allocation2] sm:$0xff]
    %v96 = vld [vmem:[#allocation2 + $0x8] sm:$0xff]
    %v97 = vld [vmem:[#allocation2 + $0x10] sm:$0xff]
    %v98 = vld [vmem:[#allocation2 + $0x18] sm:$0xff]
    %v99 = vld [vmem:[#allocation2 + $0x20] sm:$0xff]
    %v100 = vld [vmem:[#allocation2 + $0x28] sm:$0xff]
    %v101 = vld [vmem:[#allocation2 + $0x30] sm:$0xff]
    %v102 = vld [vmem:[#allocation2 + $0x38] sm:$0xff]
    %v103 = vld [vmem:[#allocation2 + $0x40] sm:$0xff]
    %v104 = vld [vmem:[#allocation2 + $0x48] sm:$0xff]
    %v105 = vld [vmem:[#allocation2 + $0x50] sm:$0xff]
    %v106 = vld [vmem:[#allocation2 + $0x58] sm:$0xff]
    %v107 = vld [vmem:[#allocation2 + $0x60] sm:$0xff]
    %v108 = vld [vmem:[#allocation2 + $0x68] sm:$0xff]
    %v109 = vld [vmem:[#allocation2 + $0x70] sm:$0xff]
    %v110 = vld [vmem:[#allocation2 + $0x78] sm:$0xff]
    %v111 = vld [vmem:[#allocation2 + $0x80] sm:$0xff]
    %v112 = vld [vmem:[#allocation2 + $0x88] sm:$0xff]
    %v113 = vld [vmem:[#allocation2 + $0x90] sm:$0xff]
    %v114 = vld [vmem:[#allocation2 + $0x98] sm:$0xff]
    %v115 = vld [vmem:[#allocation2 + $0xa0] sm:$0xff]
    %v116 = vld [vmem:[#allocation2 + $0xa8] sm:$0xff]
    %v117 = vld [vmem:[#allocation2 + $0xb0] sm:$0xff]
    %v118 = vld [vmem:[#allocation2 + $0xb8] sm:$0xff]
    %v119 = vld [vmem:[#allocation2 + $0xc0] sm:$0xff]
    %v120 = vld [vmem:[#allocation2 + $0xc8] sm:$0xff]
    %v121 = vld [vmem:[#allocation2 + $0xd0] sm:$0xff]
    %v122 = vld [vmem:[#allocation2 + $0xd8] sm:$0xff]
    %v123 = vld [vmem:[#allocation2 + $0xe0] sm:$0xff]
    %v124 = vld [vmem:[#allocation2 + $0xe8] sm:$0xff]
    %v125 = vld [vmem:[#allocation2 + $0xf0] sm:$0xff]
    %v126 = vld [vmem:[#allocation2 + $0xf8] sm:$0xff]
    %v127 = vld [vmem:[#allocation3] sm:$0xff]
    %v128 = vld [vmem:[#allocation3 + $0x8] sm:$0xff]
    %v129 = vld [vmem:[#allocation3 + $0x10] sm:$0xff]
    %v130 = vld [vmem:[#allocation3 + $0x18] sm:$0xff]
    %v131 = vld [vmem:[#allocation3 + $0x20] sm:$0xff]
    %v132 = vld [vmem:[#allocation3 + $0x28] sm:$0xff]
    %v133 = vld [vmem:[#allocation3 + $0x30] sm:$0xff]
    %v134 = vld [vmem:[#allocation3 + $0x38] sm:$0xff]
    %v135 = vld [vmem:[#allocation3 + $0x40] sm:$0xff]
    %v136 = vld [vmem:[#allocation3 + $0x48] sm:$0xff]
    %v137 = vld [vmem:[#allocation3 + $0x50] sm:$0xff]
    %v138 = vld [vmem:[#allocation3 + $0x58] sm:$0xff]
    %v139 = vld [vmem:[#allocation3 + $0x60] sm:$0xff]
    %v140 = vld [vmem:[#allocation3 + $0x68] sm:$0xff]
    %v141 = vld [vmem:[#allocation3 + $0x70] sm:$0xff]
    %v142 = vld [vmem:[#allocation3 + $0x78] sm:$0xff]
    %v143 = vld [vmem:[#allocation3 + $0x80] sm:$0xff]
    %v144 = vld [vmem:[#allocation3 + $0x88] sm:$0xff]
    %v145 = vld [vmem:[#allocation3 + $0x90] sm:$0xff]
    %v146 = vld [vmem:[#allocation3 + $0x98] sm:$0xff]
    %v147 = vld [vmem:[#allocation3 + $0xa0] sm:$0xff]
    %v148 = vld [vmem:[#allocation3 + $0xa8] sm:$0xff]
    %v149 = vld [vmem:[#allocation3 + $0xb0] sm:$0xff]
    %v150 = vld [vmem:[#allocation3 + $0xb8] sm:$0xff]
    %v151 = vld [vmem:[#allocation3 + $0xc0] sm:$0xff]
    %v152 = vld [vmem:[#allocation3 + $0xc8] sm:$0xff]
    %v153 = vld [vmem:[#allocation3 + $0xd0] sm:$0xff]
    %v154 = vld [vmem:[#allocation3 + $0xd8] sm:$0xff]
    %v155 = vld [vmem:[#allocation3 + $0xe0] sm:$0xff]
    %v156 = vld [vmem:[#allocation3 + $0xe8] sm:$0xff]
    %v157 = vld [vmem:[#allocation3 + $0xf0] sm:$0xff]
    %v158 = vld [vmem:[#allocation3 + $0xf8] sm:$0xff]
    %v159 = vld [vmem:[#allocation3 + $0x100] sm:$0xff]
    %v160 = vld [vmem:[#allocation3 + $0x108] sm:$0xff]
    %v161 = vld [vmem:[#allocation3 + $0x110] sm:$0xff]
    %v162 = vld [vmem:[#allocation3 + $0x118] sm:$0xff]
    %v163 = vld [vmem:[#allocation3 + $0x120] sm:$0xff]
    %v164 = vld [vmem:[#allocation3 + $0x128] sm:$0xff]
    %v165 = vld [vmem:[#allocation3 + $0x130] sm:$0xff]
    %v166 = vld [vmem:[#allocation3 + $0x138] sm:$0xff]
    %v167 = vld [vmem:[#allocation3 + $0x140] sm:$0xff]
    %v168 = vld [vmem:[#allocation3 + $0x148] sm:$0xff]
    %v169 = vld [vmem:[#allocation3 + $0x150] sm:$0xff]
    %v170 = vld [vmem:[#allocation3 + $0x158] sm:$0xff]
    %v171 = vld [vmem:[#allocation3 + $0x160] sm:$0xff]
    %v172 = vld [vmem:[#allocation3 + $0x168] sm:$0xff]
    %v173 = vld [vmem:[#allocation3 + $0x170] sm:$0xff]
    %v174 = vld [vmem:[#allocation3 + $0x178] sm:$0xff]
    %v175 = vld [vmem:[#allocation3 + $0x180] sm:$0xff]
    %v176 = vld [vmem:[#allocation3 + $0x188] sm:$0xff]
    %v177 = vld [vmem:[#allocation3 + $0x190] sm:$0xff]
    %v178 = vld [vmem:[#allocation3 + $0x198] sm:$0xff]
    %v179 = vld [vmem:[#allocation3 + $0x1a0] sm:$0xff]
    %v180 = vld [vmem:[#allocation3 + $0x1a8] sm:$0xff]
    %v181 = vld [vmem:[#allocation3 + $0x1b0] sm:$0xff]
    %v182 = vld [vmem:[#allocation3 + $0x1b8] sm:$0xff]
    %v183 = vld [vmem:[#allocation3 + $0x1c0] sm:$0xff]
    %v184 = vld [vmem:[#allocation3 + $0x1c8] sm:$0xff]
    %v185 = vld [vmem:[#allocation3 + $0x1d0] sm:$0xff]
    %v186 = vld [vmem:[#allocation3 + $0x1d8] sm:$0xff]
    %v187 = vld [vmem:[#allocation3 + $0x1e0] sm:$0xff]
    %v188 = vld [vmem:[#allocation3 + $0x1e8] sm:$0xff]
    %v189 = vld [vmem:[#allocation3 + $0x1f0] sm:$0xff]
    %v190 = vld [vmem:[#allocation3 + $0x1f8] sm:$0xff]
    %v191 = vld [vmem:[#allocation6] sm:$0xff]
    %v192 = vld [vmem:[#allocation6 + $0x8] sm:$0xff]
    %v193 = vld [vmem:[#allocation6 + $0x10] sm:$0xff]
    %v194 = vld [vmem:[#allocation6 + $0x18] sm:$0xff]
    %v195 = vld [vmem:[#allocation6 + $0x20] sm:$0xff]
    %v196 = vld [vmem:[#allocation6 + $0x28] sm:$0xff]
    %v197 = vld [vmem:[#allocation6 + $0x30] sm:$0xff]
    %v198 = vld [vmem:[#allocation6 + $0x38] sm:$0xff]
    %v199 = vld [vmem:[#allocation6 + $0x40] sm:$0xff]
    %v200 = vld [vmem:[#allocation6 + $0x48] sm:$0xff]
    %v201 = vld [vmem:[#allocation6 + $0x50] sm:$0xff]
    %v202 = vld [vmem:[#allocation6 + $0x58] sm:$0xff]
    %v203 = vld [vmem:[#allocation6 + $0x60] sm:$0xff]
    %v204 = vld [vmem:[#allocation6 + $0x68] sm:$0xff]
    %v205 = vld [vmem:[#allocation6 + $0x70] sm:$0xff]
    %v206 = vld [vmem:[#allocation6 + $0x78] sm:$0xff]
    %v207 = vld [vmem:[#allocation6 + $0x80] sm:$0xff]
    %v208 = vld [vmem:[#allocation6 + $0x88] sm:$0xff]
    %v209 = vld [vmem:[#allocation6 + $0x90] sm:$0xff]
    %v210 = vld [vmem:[#allocation6 + $0x98] sm:$0xff]
    %v211 = vld [vmem:[#allocation6 + $0xa0] sm:$0xff]
    %v212 = vld [vmem:[#allocation6 + $0xa8] sm:$0xff]
    %v213 = vld [vmem:[#allocation6 + $0xb0] sm:$0xff]
    %v214 = vld [vmem:[#allocation6 + $0xb8] sm:$0xff]
    %v215 = vld [vmem:[#allocation6 + $0xc0] sm:$0xff]
    %v216 = vld [vmem:[#allocation6 + $0xc8] sm:$0xff]
    %v217 = vld [vmem:[#allocation6 + $0xd0] sm:$0xff]
    %v218 = vld [vmem:[#allocation6 + $0xd8] sm:$0xff]
    %v219 = vld [vmem:[#allocation6 + $0xe0] sm:$0xff]
    %v220 = vld [vmem:[#allocation6 + $0xe8] sm:$0xff]
    %v221 = vld [vmem:[#allocation6 + $0xf0] sm:$0xff]
    %v222 = vld [vmem:[#allocation6 + $0xf8] sm:$0xff]
    %223 = vmatprep.subr.mxu0 0.0
    %224 = vmatpush1.msra.mxu0 %v206
    %225 = vmatprep.subr.mxu0 0.0
    %226 = vmatpush1.msra.mxu0 %v205
    %227 = vmatprep.subr.mxu0 0.0
    %228 = vmatpush1.msra.mxu0 %v204
    %229 = vmatprep.subr.mxu0 0.0
    %230 = vmatpush1.msra.mxu0 %v203
    %231 = vmatprep.subr.mxu0 0.0
    %232 = vmatpush1.msra.mxu0 %v202
    %233 = vmatprep.subr.mxu0 0.0
    %234 = vmatpush1.msra.mxu0 %v201
    %235 = vmatprep.subr.mxu0 0.0
    %236 = vmatpush1.msra.mxu0 %v200
    %237 = vmatprep.subr.mxu0 0.0
    %238 = vmatpush1.msra.mxu0 %v199
    %239 = vmatprep.subr.mxu0 0.0
    %240 = vmatpush1.msra.mxu0 %v198
    %241 = vmatprep.subr.mxu0 0.0
    %242 = vmatpush1.msra.mxu0 %v197
    %243 = vmatprep.subr.mxu0 0.0
    %244 = vmatpush1.msra.mxu0 %v196
    %245 = vmatprep.subr.mxu0 0.0
    %246 = vmatpush1.msra.mxu0 %v195
    %247 = vmatprep.subr.mxu0 0.0
    %248 = vmatpush1.msra.mxu0 %v194
    %249 = vmatprep.subr.mxu0 0.0
    %250 = vmatpush1.msra.mxu0 %v193
    %251 = vmatprep.subr.mxu0 0.0
    %252 = vmatpush1.msra.mxu0 %v192
    %253 = vmatprep.subr.mxu0 0.0
    %254 = vmatpush1.msra.mxu0 %v191
    %255 = vmatprep.subr.mxu0 0.0
    %256 = vmatpush2.msra.mxu0 %v222
    %257 = vmatprep.subr.mxu0 0.0
    %258 = vmatpush2.msra.mxu0 %v221
    %259 = vmatprep.subr.mxu0 0.0
    %260 = vmatpush2.msra.mxu0 %v220
    %261 = vmatprep.subr.mxu0 0.0
    %262 = vmatpush2.msra.mxu0 %v219
    %263 = vmatprep.subr.mxu0 0.0
    %264 = vmatpush2.msra.mxu0 %v218
    %265 = vmatprep.subr.mxu0 0.0
    %266 = vmatpush2.msra.mxu0 %v217
    %267 = vmatprep.subr.mxu0 0.0
    %268 = vmatpush2.msra.mxu0 %v216
    %269 = vmatprep.subr.mxu0 0.0
    %270 = vmatpush2.msra.mxu0 %v215
    %271 = vmatprep.subr.mxu0 0.0
    %272 = vmatpush2.msra.mxu0 %v214
    %273 = vmatprep.subr.mxu0 0.0
    %274 = vmatpush2.msra.mxu0 %v213
    %275 = vmatprep.subr.mxu0 0.0
    %276 = vmatpush2.msra.mxu0 %v212
    %277 = vmatprep.subr.mxu0 0.0
    %278 = vmatpush2.msra.mxu0 %v211
    %279 = vmatprep.subr.mxu0 0.0
    %280 = vmatpush2.msra.mxu0 %v210
    %281 = vmatprep.subr.mxu0 0.0
    %282 = vmatpush2.msra.mxu0 %v209
    %283 = vmatprep.subr.mxu0 0.0
    %284 = vmatpush2.msra.mxu0 %v208
    %285 = vmatprep.subr.mxu0 0.0
    %286 = vmatpush2.msra.mxu0 %v207
    %287 = vmatprep.mubr.f32.mxu0 %v128
    %288 = vmatmul.mubr.f32.gmra.mxu0 %v127
    %v289 = vpop.f32.mrf.mxu0
    %v290 = vadd.f32 0.0, %v289
    %v291 = vpop.f32.mrf.mxu0
    %292 = vmatprep.mubr.f32.mxu0 %v130
    %293 = vmatmul.mubr.f32.gmra.mxu0 %v129
    %v294 = vpop.f32.mrf.mxu0
    %v295 = vadd.f32 0.0, %v294
    %v296 = vpop.f32.mrf.mxu0
    %297 = vmatprep.mubr.f32.mxu0 %v132
    %298 = vmatmul.mubr.f32.gmra.mxu0 %v131
    %v299 = vpop.f32.mrf.mxu0
    %v300 = vadd.f32 0.0, %v299
    %v301 = vpop.f32.mrf.mxu0
    %302 = vmatprep.mubr.f32.mxu0 %v134
    %303 = vmatmul.mubr.f32.gmra.mxu0 %v133
    %v304 = vpop.f32.mrf.mxu0
    %v305 = vadd.f32 0.0, %v304
    %v306 = vpop.f32.mrf.mxu0
    %307 = vmatprep.mubr.f32.mxu0 %v136
    %308 = vmatmul.mubr.f32.gmra.mxu0 %v135
    %v309 = vpop.f32.mrf.mxu0
    %v310 = vadd.f32 0.0, %v309
    %v311 = vpop.f32.mrf.mxu0
    %312 = vmatprep.mubr.f32.mxu0 %v138
    %313 = vmatmul.mubr.f32.gmra.mxu0 %v137
    %v314 = vpop.f32.mrf.mxu0
    %v315 = vadd.f32 0.0, %v314
    %v316 = vpop.f32.mrf.mxu0
    %317 = vmatprep.mubr.f32.mxu0 %v140
    %318 = vmatmul.mubr.f32.gmra.mxu0 %v139
    %v319 = vpop.f32.mrf.mxu0
    %v320 = vadd.f32 0.0, %v319
    %v321 = vpop.f32.mrf.mxu0
    %322 = vmatprep.mubr.f32.mxu0 %v142
    %323 = vmatmul.mubr.f32.gmra.mxu0 %v141
    %v324 = vpop.f32.mrf.mxu0
    %v325 = vadd.f32 0.0, %v324
    %v326 = vpop.f32.mrf.mxu0
    %327 = vmatprep.mubr.f32.mxu0 %v144
    %328 = vmatmul.mubr.f32.gmra.mxu0 %v143
    %v329 = vpop.f32.mrf.mxu0
    %v330 = vadd.f32 0.0, %v329
    %v331 = vpop.f32.mrf.mxu0
    %332 = vmatprep.mubr.f32.mxu0 %v146
    %333 = vmatmul.mubr.f32.gmra.mxu0 %v145
    %v334 = vpop.f32.mrf.mxu0
    %v335 = vadd.f32 0.0, %v334
    %v336 = vpop.f32.mrf.mxu0
    %337 = vmatprep.mubr.f32.mxu0 %v148
    %338 = vmatmul.mubr.f32.gmra.mxu0 %v147
    %v339 = vpop.f32.mrf.mxu0
    %v340 = vadd.f32 0.0, %v339
    %v341 = vpop.f32.mrf.mxu0
    %342 = vmatprep.mubr.f32.mxu0 %v150
    %343 = vmatmul.mubr.f32.gmra.mxu0 %v149
    %v344 = vpop.f32.mrf.mxu0
    %v345 = vadd.f32 0.0, %v344
    %v346 = vpop.f32.mrf.mxu0
    %347 = vmatprep.mubr.f32.mxu0 %v152
    %348 = vmatmul.mubr.f32.gmra.mxu0 %v151
    %v349 = vpop.f32.mrf.mxu0
    %v350 = vadd.f32 0.0, %v349
    %v351 = vpop.f32.mrf.mxu0
    %352 = vmatprep.mubr.f32.mxu0 %v154
    %353 = vmatmul.mubr.f32.gmra.mxu0 %v153
    %v354 = vpop.f32.mrf.mxu0
    %v355 = vadd.f32 0.0, %v354
    %v356 = vpop.f32.mrf.mxu0
    %357 = vmatprep.mubr.f32.mxu0 %v156
    %358 = vmatmul.mubr.f32.gmra.mxu0 %v155
    %v359 = vpop.f32.mrf.mxu0
    %v360 = vadd.f32 0.0, %v359
    %v361 = vpop.f32.mrf.mxu0
    %362 = vmatprep.mubr.f32.mxu0 %v158
    %363 = vmatmul.mubr.f32.gmra.mxu0 %v157
    %v364 = vpop.f32.mrf.mxu0
    %v365 = vadd.f32 0.0, %v364
    %v366 = vpop.f32.mrf.mxu0
    %367 = vmatprep.mubr.f32.mxu0 %v160
    %368 = vmatmul.mubr.f32.gmra.mxu0 %v159
    %v369 = vpop.f32.mrf.mxu0
    %v370 = vadd.f32 0.0, %v369
    %v371 = vpop.f32.mrf.mxu0
    %372 = vmatprep.mubr.f32.mxu0 %v162
    %373 = vmatmul.mubr.f32.gmra.mxu0 %v161
    %v374 = vpop.f32.mrf.mxu0
    %v375 = vadd.f32 0.0, %v374
    %v376 = vpop.f32.mrf.mxu0
    %377 = vmatprep.mubr.f32.mxu0 %v164
    %378 = vmatmul.mubr.f32.gmra.mxu0 %v163
    %v379 = vpop.f32.mrf.mxu0
    %v380 = vadd.f32 0.0, %v379
    %v381 = vpop.f32.mrf.mxu0
    %382 = vmatprep.mubr.f32.mxu0 %v166
    %383 = vmatmul.mubr.f32.gmra.mxu0 %v165
    %v384 = vpop.f32.mrf.mxu0
    %v385 = vadd.f32 0.0, %v384
    %v386 = vpop.f32.mrf.mxu0
    %387 = vmatprep.mubr.f32.mxu0 %v168
    %388 = vmatmul.mubr.f32.gmra.mxu0 %v167
    %v389 = vpop.f32.mrf.mxu0
    %v390 = vadd.f32 0.0, %v389
    %v391 = vpop.f32.mrf.mxu0
    %392 = vmatprep.mubr.f32.mxu0 %v170
    %393 = vmatmul.mubr.f32.gmra.mxu0 %v169
    %v394 = vpop.f32.mrf.mxu0
    %v395 = vadd.f32 0.0, %v394
    %v396 = vpop.f32.mrf.mxu0
    %397 = vmatprep.mubr.f32.mxu0 %v172
    %398 = vmatmul.mubr.f32.gmra.mxu0 %v171
    %v399 = vpop.f32.mrf.mxu0
    %v400 = vadd.f32 0.0, %v399
    %v401 = vpop.f32.mrf.mxu0
    %402 = vmatprep.mubr.f32.mxu0 %v174
    %403 = vmatmul.mubr.f32.gmra.mxu0 %v173
    %v404 = vpop.f32.mrf.mxu0
    %v405 = vadd.f32 0.0, %v404
    %v406 = vpop.f32.mrf.mxu0
    %407 = vmatprep.mubr.f32.mxu0 %v176
    %408 = vmatmul.mubr.f32.gmra.mxu0 %v175
    %v409 = vpop.f32.mrf.mxu0
    %v410 = vadd.f32 0.0, %v409
    %v411 = vpop.f32.mrf.mxu0
    %412 = vmatprep.mubr.f32.mxu0 %v178
    %413 = vmatmul.mubr.f32.gmra.mxu0 %v177
    %v414 = vpop.f32.mrf.mxu0
    %v415 = vadd.f32 0.0, %v414
    %v416 = vpop.f32.mrf.mxu0
    %417 = vmatprep.mubr.f32.mxu0 %v180
    %418 = vmatmul.mubr.f32.gmra.mxu0 %v179
    %v419 = vpop.f32.mrf.mxu0
    %v420 = vadd.f32 0.0, %v419
    %v421 = vpop.f32.mrf.mxu0
    %422 = vmatprep.mubr.f32.mxu0 %v182
    %423 = vmatmul.mubr.f32.gmra.mxu0 %v181
    %v424 = vpop.f32.mrf.mxu0
    %v425 = vadd.f32 0.0, %v424
    %v426 = vpop.f32.mrf.mxu0
    %427 = vmatprep.mubr.f32.mxu0 %v184
    %428 = vmatmul.mubr.f32.gmra.mxu0 %v183
    %v429 = vpop.f32.mrf.mxu0
    %v430 = vadd.f32 0.0, %v429
    %v431 = vpop.f32.mrf.mxu0
    %432 = vmatprep.mubr.f32.mxu0 %v186
    %433 = vmatmul.mubr.f32.gmra.mxu0 %v185
    %v434 = vpop.f32.mrf.mxu0
    %v435 = vadd.f32 0.0, %v434
    %v436 = vpop.f32.mrf.mxu0
    %437 = vmatprep.mubr.f32.mxu0 %v188
    %438 = vmatmul.mubr.f32.gmra.mxu0 %v187
    %v439 = vpop.f32.mrf.mxu0
    %v440 = vadd.f32 0.0, %v439
    %v441 = vpop.f32.mrf.mxu0
    %442 = vmatprep.mubr.f32.mxu0 %v190
    %443 = vmatmul.mubr.f32.gmra.mxu0 %v189
    %v444 = vpop.f32.mrf.mxu0
    %v445 = vadd.f32 0.0, %v444
    %v446 = vpop.f32.mrf.mxu0
    %447 = vdwg.mxu0
    %v448 = vadd.f32 %v95, %v290
    %v449 = vadd.f32 %v96, %v295
    %v450 = vadd.f32 %v97, %v300
    %v451 = vadd.f32 %v98, %v305
    %v452 = vadd.f32 %v99, %v310
    %v453 = vadd.f32 %v100, %v315
    %v454 = vadd.f32 %v101, %v320
    %v455 = vadd.f32 %v102, %v325
    %v456 = vadd.f32 %v103, %v330
    %v457 = vadd.f32 %v104, %v335
    %v458 = vadd.f32 %v105, %v340
    %v459 = vadd.f32 %v106, %v345
    %v460 = vadd.f32 %v107, %v350
    %v461 = vadd.f32 %v108, %v355
    %v462 = vadd.f32 %v109, %v360
    %v463 = vadd.f32 %v110, %v365
    %v464 = vadd.f32 %v111, %v370
    %v465 = vadd.f32 %v112, %v375
    %v466 = vadd.f32 %v113, %v380
    %v467 = vadd.f32 %v114, %v385
    %v468 = vadd.f32 %v115, %v390
    %v469 = vadd.f32 %v116, %v395
    %v470 = vadd.f32 %v117, %v400
    %v471 = vadd.f32 %v118, %v405
    %v472 = vadd.f32 %v119, %v410
    %v473 = vadd.f32 %v120, %v415
    %v474 = vadd.f32 %v121, %v420
    %v475 = vadd.f32 %v122, %v425
    %v476 = vadd.f32 %v123, %v430
    %v477 = vadd.f32 %v124, %v435
    %v478 = vadd.f32 %v125, %v440
    %v479 = vadd.f32 %v126, %v445
    %480 = vst [vmem:[#allocation2] sm:$0xff] %v448
    %481 = vst [vmem:[#allocation2 + $0x8] sm:$0xff] %v449
    %482 = vst [vmem:[#allocation2 + $0x10] sm:$0xff] %v450
    %483 = vst [vmem:[#allocation2 + $0x18] sm:$0xff] %v451
    %484 = vst [vmem:[#allocation2 + $0x20] sm:$0xff] %v452
    %485 = vst [vmem:[#allocation2 + $0x28] sm:$0xff] %v453
    %486 = vst [vmem:[#allocation2 + $0x30] sm:$0xff] %v454
    %487 = vst [vmem:[#allocation2 + $0x38] sm:$0xff] %v455
    %488 = vst [vmem:[#allocation2 + $0x40] sm:$0xff] %v456
    %489 = vst [vmem:[#allocation2 + $0x48] sm:$0xff] %v457
    %490 = vst [vmem:[#allocation2 + $0x50] sm:$0xff] %v458
    %491 = vst [vmem:[#allocation2 + $0x58] sm:$0xff] %v459
    %492 = vst [vmem:[#allocation2 + $0x60] sm:$0xff] %v460
    %493 = vst [vmem:[#allocation2 + $0x68] sm:$0xff] %v461
    %494 = vst [vmem:[#allocation2 + $0x70] sm:$0xff] %v462
    %495 = vst [vmem:[#allocation2 + $0x78] sm:$0xff] %v463
    %496 = vst [vmem:[#allocation2 + $0x80] sm:$0xff] %v464
    %497 = vst [vmem:[#allocation2 + $0x88] sm:$0xff] %v465
    %498 = vst [vmem:[#allocation2 + $0x90] sm:$0xff] %v466
    %499 = vst [vmem:[#allocation2 + $0x98] sm:$0xff] %v467
    %500 = vst [vmem:[#allocation2 + $0xa0] sm:$0xff] %v468
    %501 = vst [vmem:[#allocation2 + $0xa8] sm:$0xff] %v469
    %502 = vst [vmem:[#allocation2 + $0xb0] sm:$0xff] %v470
    %503 = vst [vmem:[#allocation2 + $0xb8] sm:$0xff] %v471
    %504 = vst [vmem:[#allocation2 + $0xc0] sm:$0xff] %v472
    %505 = vst [vmem:[#allocation2 + $0xc8] sm:$0xff] %v473
    %506 = vst [vmem:[#allocation2 + $0xd0] sm:$0xff] %v474
    %507 = vst [vmem:[#allocation2 + $0xd8] sm:$0xff] %v475
    %508 = vst [vmem:[#allocation2 + $0xe0] sm:$0xff] %v476
    %509 = vst [vmem:[#allocation2 + $0xe8] sm:$0xff] %v477
    %510 = vst [vmem:[#allocation2 + $0xf0] sm:$0xff] %v478
    %511 = vst [vmem:[#allocation2 + $0xf8] sm:$0xff] %v479
    // Predicated region
    $region30: #{tpu_custom_call.1} parent=1 // pred_check
      %p512 = pneg %p59
    $region31: #{tpu_custom_call.1} parent=1 // pred_check_branch
      %514 = sbr.rel (%p512) target = $region33
    $region32: #{tpu_custom_call.1} parent=1 // pred_region
      %v515 = vld [vmem:[#allocation2] sm:$0xff]
      %v516 = vld [vmem:[#allocation2 + $0x8] sm:$0xff]
      %v517 = vld [vmem:[#allocation2 + $0x10] sm:$0xff]
      %v518 = vld [vmem:[#allocation2 + $0x18] sm:$0xff]
      %v519 = vld [vmem:[#allocation2 + $0x20] sm:$0xff]
      %v520 = vld [vmem:[#allocation2 + $0x28] sm:$0xff]
      %v521 = vld [vmem:[#allocation2 + $0x30] sm:$0xff]
      %v522 = vld [vmem:[#allocation2 + $0x38] sm:$0xff]
      %v523 = vld [vmem:[#allocation2 + $0x40] sm:$0xff]
      %v524 = vld [vmem:[#allocation2 + $0x48] sm:$0xff]
      %v525 = vld [vmem:[#allocation2 + $0x50] sm:$0xff]
      %v526 = vld [vmem:[#allocation2 + $0x58] sm:$0xff]
      %v527 = vld [vmem:[#allocation2 + $0x60] sm:$0xff]
      %v528 = vld [vmem:[#allocation2 + $0x68] sm:$0xff]
      %v529 = vld [vmem:[#allocation2 + $0x70] sm:$0xff]
      %v530 = vld [vmem:[#allocation2 + $0x78] sm:$0xff]
      %v531 = vld [vmem:[#allocation2 + $0x80] sm:$0xff]
      %v532 = vld [vmem:[#allocation2 + $0x88] sm:$0xff]
      %v533 = vld [vmem:[#allocation2 + $0x90] sm:$0xff]
      %v534 = vld [vmem:[#allocation2 + $0x98] sm:$0xff]
      %v535 = vld [vmem:[#allocation2 + $0xa0] sm:$0xff]
      %v536 = vld [vmem:[#allocation2 + $0xa8] sm:$0xff]
      %v537 = vld [vmem:[#allocation2 + $0xb0] sm:$0xff]
      %v538 = vld [vmem:[#allocation2 + $0xb8] sm:$0xff]
      %v539 = vld [vmem:[#allocation2 + $0xc0] sm:$0xff]
      %v540 = vld [vmem:[#allocation2 + $0xc8] sm:$0xff]
      %v541 = vld [vmem:[#allocation2 + $0xd0] sm:$0xff]
      %v542 = vld [vmem:[#allocation2 + $0xd8] sm:$0xff]
      %v543 = vld [vmem:[#allocation2 + $0xe0] sm:$0xff]
      %v544 = vld [vmem:[#allocation2 + $0xe8] sm:$0xff]
      %v545 = vld [vmem:[#allocation2 + $0xf0] sm:$0xff]
      %v546 = vld [vmem:[#allocation2 + $0xf8] sm:$0xff]
      %547 = vst [vmem:[#allocation9] sm:$0xff] %v515
      %548 = vst [vmem:[#allocation9 + $0x8] sm:$0xff] %v516
      %549 = vst [vmem:[#allocation9 + $0x10] sm:$0xff] %v517
      %550 = vst [vmem:[#allocation9 + $0x18] sm:$0xff] %v518
      %551 = vst [vmem:[#allocation9 + $0x20] sm:$0xff] %v519
      %552 = vst [vmem:[#allocation9 + $0x28] sm:$0xff] %v520
      %553 = vst [vmem:[#allocation9 + $0x30] sm:$0xff] %v521
      %554 = vst [vmem:[#allocation9 + $0x38] sm:$0xff] %v522
      %555 = vst [vmem:[#allocation9 + $0x40] sm:$0xff] %v523
      %556 = vst [vmem:[#allocation9 + $0x48] sm:$0xff] %v524
      %557 = vst [vmem:[#allocation9 + $0x50] sm:$0xff] %v525
      %558 = vst [vmem:[#allocation9 + $0x58] sm:$0xff] %v526
      %559 = vst [vmem:[#allocation9 + $0x60] sm:$0xff] %v527
      %560 = vst [vmem:[#allocation9 + $0x68] sm:$0xff] %v528
      %561 = vst [vmem:[#allocation9 + $0x70] sm:$0xff] %v529
      %562 = vst [vmem:[#allocation9 + $0x78] sm:$0xff] %v530
      %563 = vst [vmem:[#allocation9 + $0x80] sm:$0xff] %v531
      %564 = vst [vmem:[#allocation9 + $0x88] sm:$0xff] %v532
      %565 = vst [vmem:[#allocation9 + $0x90] sm:$0xff] %v533
      %566 = vst [vmem:[#allocation9 + $0x98] sm:$0xff] %v534
      %567 = vst [vmem:[#allocation9 + $0xa0] sm:$0xff] %v535
      %568 = vst [vmem:[#allocation9 + $0xa8] sm:$0xff] %v536
      %569 = vst [vmem:[#allocation9 + $0xb0] sm:$0xff] %v537
      %570 = vst [vmem:[#allocation9 + $0xb8] sm:$0xff] %v538
      %571 = vst [vmem:[#allocation9 + $0xc0] sm:$0xff] %v539
      %572 = vst [vmem:[#allocation9 + $0xc8] sm:$0xff] %v540
      %573 = vst [vmem:[#allocation9 + $0xd0] sm:$0xff] %v541
      %574 = vst [vmem:[#allocation9 + $0xd8] sm:$0xff] %v542
      %575 = vst [vmem:[#allocation9 + $0xe0] sm:$0xff] %v543
      %576 = vst [vmem:[#allocation9 + $0xe8] sm:$0xff] %v544
      %577 = vst [vmem:[#allocation9 + $0xf0] sm:$0xff] %v545
      %578 = vst [vmem:[#allocation9 + $0xf8] sm:$0xff] %v546
      %v579 = vld [vmem:[#allocation8] sm:$0xff]
      %v580 = vld [vmem:[#allocation8 + $0x8] sm:$0xff]
      %v581 = vld [vmem:[#allocation8 + $0x10] sm:$0xff]
      %v582 = vld [vmem:[#allocation8 + $0x18] sm:$0xff]
      %v583 = vld [vmem:[#allocation8 + $0x20] sm:$0xff]
      %v584 = vld [vmem:[#allocation8 + $0x28] sm:$0xff]
      %v585 = vld [vmem:[#allocation8 + $0x30] sm:$0xff]
      %v586 = vld [vmem:[#allocation8 + $0x38] sm:$0xff]
      %v587 = vld [vmem:[#allocation8 + $0x40] sm:$0xff]
      %v588 = vld [vmem:[#allocation8 + $0x48] sm:$0xff]
      %v589 = vld [vmem:[#allocation8 + $0x50] sm:$0xff]
      %v590 = vld [vmem:[#allocation8 + $0x58] sm:$0xff]
      %v591 = vld [vmem:[#allocation8 + $0x60] sm:$0xff]
      %v592 = vld [vmem:[#allocation8 + $0x68] sm:$0xff]
      %v593 = vld [vmem:[#allocation8 + $0x70] sm:$0xff]
      %v594 = vld [vmem:[#allocation8 + $0x78] sm:$0xff]
      %v595 = vld [vmem:[#allocation8 + $0x80] sm:$0xff]
      %v596 = vld [vmem:[#allocation8 + $0x88] sm:$0xff]
      %v597 = vld [vmem:[#allocation8 + $0x90] sm:$0xff]
      %v598 = vld [vmem:[#allocation8 + $0x98] sm:$0xff]
      %v599 = vld [vmem:[#allocation8 + $0xa0] sm:$0xff]
      %v600 = vld [vmem:[#allocation8 + $0xa8] sm:$0xff]
      %v601 = vld [vmem:[#allocation8 + $0xb0] sm:$0xff]
      %v602 = vld [vmem:[#allocation8 + $0xb8] sm:$0xff]
      %v603 = vld [vmem:[#allocation8 + $0xc0] sm:$0xff]
      %v604 = vld [vmem:[#allocation8 + $0xc8] sm:$0xff]
      %v605 = vld [vmem:[#allocation8 + $0xd0] sm:$0xff]
      %v606 = vld [vmem:[#allocation8 + $0xd8] sm:$0xff]
      %v607 = vld [vmem:[#allocation8 + $0xe0] sm:$0xff]
      %v608 = vld [vmem:[#allocation8 + $0xe8] sm:$0xff]
      %v609 = vld [vmem:[#allocation8 + $0xf0] sm:$0xff]
      %v610 = vld [vmem:[#allocation8 + $0xf8] sm:$0xff]
      %v611 = vadd.f32 %v579, %v515
      %v612 = vadd.f32 %v580, %v516
      %v613 = vadd.f32 %v581, %v517
      %v614 = vadd.f32 %v582, %v518
      %v615 = vadd.f32 %v583, %v519
      %v616 = vadd.f32 %v584, %v520
      %v617 = vadd.f32 %v585, %v521
      %v618 = vadd.f32 %v586, %v522
      %v619 = vadd.f32 %v587, %v523
      %v620 = vadd.f32 %v588, %v524
      %v621 = vadd.f32 %v589, %v525
      %v622 = vadd.f32 %v590, %v526
      %v623 = vadd.f32 %v591, %v527
      %v624 = vadd.f32 %v592, %v528
      %v625 = vadd.f32 %v593, %v529
      %v626 = vadd.f32 %v594, %v530
      %v627 = vadd.f32 %v595, %v531
      %v628 = vadd.f32 %v596, %v532
      %v629 = vadd.f32 %v597, %v533
      %v630 = vadd.f32 %v598, %v534
      %v631 = vadd.f32 %v599, %v535
      %v632 = vadd.f32 %v600, %v536
      %v633 = vadd.f32 %v601, %v537
      %v634 = vadd.f32 %v602, %v538
      %v635 = vadd.f32 %v603, %v539
      %v636 = vadd.f32 %v604, %v540
      %v637 = vadd.f32 %v605, %v541
      %v638 = vadd.f32 %v606, %v542
      %v639 = vadd.f32 %v607, %v543
      %v640 = vadd.f32 %v608, %v544
      %v641 = vadd.f32 %v609, %v545
      %v642 = vadd.f32 %v610, %v546
      %643 = vst [vmem:[#allocation10] sm:$0xff] %v611
      %644 = vst [vmem:[#allocation10 + $0x8] sm:$0xff] %v612
      %645 = vst [vmem:[#allocation10 + $0x10] sm:$0xff] %v613
      %646 = vst [vmem:[#allocation10 + $0x18] sm:$0xff] %v614
      %647 = vst [vmem:[#allocation10 + $0x20] sm:$0xff] %v615
      %648 = vst [vmem:[#allocation10 + $0x28] sm:$0xff] %v616
      %649 = vst [vmem:[#allocation10 + $0x30] sm:$0xff] %v617
      %650 = vst [vmem:[#allocation10 + $0x38] sm:$0xff] %v618
      %651 = vst [vmem:[#allocation10 + $0x40] sm:$0xff] %v619
      %652 = vst [vmem:[#allocation10 + $0x48] sm:$0xff] %v620
      %653 = vst [vmem:[#allocation10 + $0x50] sm:$0xff] %v621
      %654 = vst [vmem:[#allocation10 + $0x58] sm:$0xff] %v622
      %655 = vst [vmem:[#allocation10 + $0x60] sm:$0xff] %v623
      %656 = vst [vmem:[#allocation10 + $0x68] sm:$0xff] %v624
      %657 = vst [vmem:[#allocation10 + $0x70] sm:$0xff] %v625
      %658 = vst [vmem:[#allocation10 + $0x78] sm:$0xff] %v626
      %659 = vst [vmem:[#allocation10 + $0x80] sm:$0xff] %v627
      %660 = vst [vmem:[#allocation10 + $0x88] sm:$0xff] %v628
      %661 = vst [vmem:[#allocation10 + $0x90] sm:$0xff] %v629
      %662 = vst [vmem:[#allocation10 + $0x98] sm:$0xff] %v630
      %663 = vst [vmem:[#allocation10 + $0xa0] sm:$0xff] %v631
      %664 = vst [vmem:[#allocation10 + $0xa8] sm:$0xff] %v632
      %665 = vst [vmem:[#allocation10 + $0xb0] sm:$0xff] %v633
      %666 = vst [vmem:[#allocation10 + $0xb8] sm:$0xff] %v634
      %667 = vst [vmem:[#allocation10 + $0xc0] sm:$0xff] %v635
      %668 = vst [vmem:[#allocation10 + $0xc8] sm:$0xff] %v636
      %669 = vst [vmem:[#allocation10 + $0xd0] sm:$0xff] %v637
      %670 = vst [vmem:[#allocation10 + $0xd8] sm:$0xff] %v638
      %671 = vst [vmem:[#allocation10 + $0xe0] sm:$0xff] %v639
      %672 = vst [vmem:[#allocation10 + $0xe8] sm:$0xff] %v640
      %673 = vst [vmem:[#allocation10 + $0xf0] sm:$0xff] %v641
      %674 = vst [vmem:[#allocation10 + $0xf8] sm:$0xff] %v642
    $region33: #{tpu_custom_call.1} parent=1 // pred_fallthru
      _
    // Predicated region
    $region34: #{tpu_custom_call.1} parent=1 // pred_check
      _
    $region35: #{tpu_custom_call.1} parent=1 // pred_check_branch
      %676 = sbr.rel (0) target = $region37
    $region36: #{tpu_custom_call.1} parent=1 // pred_region
      %s678 = ssub.s32 4096, 4096
      %679 = vsyncadd [#allocation5], %s678
      %s680 = sshll.u32 [#allocation9], 4
      %s681 = int_to_ptr.vmem [resolvable:$true] %s680
      %686 = dma.vmem_to_hbm [thread:$0]  %s681, 4096, %s3, [#allocation5], 128, 128, 8
    $region37: #{tpu_custom_call.1} parent=1 // pred_fallthru
      _
    // Predicated region
    $region38: #{tpu_custom_call.1} parent=1 // pred_check
      _
    $region39: #{tpu_custom_call.1} parent=1 // pred_check_branch
      %688 = sbr.rel (0) target = $region41
    $region40: #{tpu_custom_call.1} parent=1 // pred_region
      %s690 = ssub.s32 4096, 4096
      %691 = vsyncadd [#allocation11], %s690
      %s692 = sshll.u32 [#allocation10], 4
      %s693 = int_to_ptr.vmem [resolvable:$true] %s692
      %698 = dma.vmem_to_hbm [thread:$0]  %s693, 4096, %s4, [#allocation11], 128, 128, 8
    $region41: #{tpu_custom_call.1} parent=1 // pred_fallthru
      _
    // Predicated region
    $region42: #{tpu_custom_call.1} parent=1 // pred_check
      _
    $region43: #{tpu_custom_call.1} parent=1 // pred_check_branch
      %700 = sbr.rel (0) target = $region45
    $region44: #{tpu_custom_call.1} parent=1 // pred_region
      %701 = dma.done [#allocation5], 4096
    $region45: #{tpu_custom_call.1} parent=1 // pred_fallthru
      _
    // Predicated region
    $region46: #{tpu_custom_call.1} parent=1 // pred_check
      _
    $region47: #{tpu_custom_call.1} parent=1 // pred_check_branch
      %703 = sbr.rel (0) target = $region49
    $region48: #{tpu_custom_call.1} parent=1 // pred_region
      %704 = dma.done [#allocation11], 4096
    $region49: #{tpu_custom_call.1} parent=1 // pred_fallthru
      _
    %705 = vsyncpa [#allocation4], 1
    %706 = vsyncpa [#allocation7], 1
    %707 = vsyncpa [#allocation5], 1
    %708 = vsyncpa [#allocation11], 1

</llo_original>
